<compile_context>
chip_gen: v7x
topology: tpu7x:2x2x1
jax: 0.10.0
libtpu: 0.0.40
codegen_flags: <defaults>
</compile_context>

<pallas_src>
import functools

import jax
import jax.numpy as jnp
from jax.experimental import pallas as pl
from jax.experimental.pallas import tpu as pltpu


def _elementwise_kernel(x_ref, t_ref, o_ref, *, feat, lanes, block_rows):
    """Elementwise CombinedLoss on a lane-dense (block_rows, lanes) tile."""
    base = pl.program_id(0) * (block_rows * lanes)
    row = jax.lax.broadcasted_iota(jnp.int32, (block_rows, lanes), 0)
    col = jax.lax.broadcasted_iota(jnp.int32, (block_rows, lanes), 1)
    g = base + row * lanes + col                      # global flat element index
    keep_sq = (g % feat) != 2                         # True everywhere except channel 2

    diff = x_ref[...].astype(jnp.float32) - t_ref[...].astype(jnp.float32)
    sq = diff * diff
    # cos is evaluated on the whole tile even though only 1/F of the elements use
    # it; it occupies the EUP slot and the kernel remains HBM-bound.
    ang = 2.0 - 2.0 * jnp.cos(diff)
    o_ref[...] = jnp.where(keep_sq, sq, ang).astype(o_ref.dtype)


def _reduce_kernel(x_ref, t_ref, o_ref, *, feat, lanes, block_rows):
    """Fused sum of CombinedLoss; o_ref is a resident (1,1) f32 accumulator."""
    i = pl.program_id(0)

    @pl.when(i == 0)
    def _():
        o_ref[...] = jnp.zeros_like(o_ref)

    base = i * (block_rows * lanes)
    row = jax.lax.broadcasted_iota(jnp.int32, (block_rows, lanes), 0)
    col = jax.lax.broadcasted_iota(jnp.int32, (block_rows, lanes), 1)
    g = base + row * lanes + col
    keep_sq = (g % feat) != 2

    diff = x_ref[...].astype(jnp.float32) - t_ref[...].astype(jnp.float32)
    val = jnp.where(keep_sq, diff * diff, 2.0 - 2.0 * jnp.cos(diff))
    # Zero-padded tail elements contribute exactly 0 in either branch
    # (diff == 0 -> sq == 0 and 2 - 2*cos(0) == 0), so no extra masking needed.
    o_ref[...] += jnp.sum(val)


def _choose_layout(n, lanes_pref, max_block_rows):
    """Pick (lanes, pad_cols, rows, block_rows, pad_rows) minimizing padding."""
    max_block_rows = max(8, int(max_block_rows))
    lanes = None
    for c in (lanes_pref, 1024, 512, 256, 128):
        if c % 128 == 0 and c <= lanes_pref and n % c == 0:
            lanes = c
            break
    if lanes is None:
        lanes = lanes_pref                    # fallback: pad the flat tail
    pad_cols = (-n) % lanes
    rows = (n + pad_cols) // lanes

    if rows <= max_block_rows:
        # Single full-extent block along rows (any row count allowed).
        return lanes, pad_cols, rows, rows, 0

    # Need block_rows to be a multiple of 8; prefer an exact divisor of rows.
    floor = max(8, min(128, max_block_rows))
    br = (max_block_rows // 8) * 8
    while br >= floor:
        if rows % br == 0:
            return lanes, pad_cols, rows, br, 0
        br -= 8

    # No good divisor: pad rows up to a multiple of the largest legal block.
    block_rows = (max_block_rows // 8) * 8
    pad_rows = (-rows) % block_rows
    return lanes, pad_cols, rows + pad_rows, block_rows, pad_rows


def combined_loss(inputs, targets, reduction="none", *, lanes=512, max_block_rows=1024):
    """Pallas implementation of CombinedLoss.forward.

    inputs, targets: arrays of shape [B, S, F] with F >= 3 (feature index 2 is
    the angular channel that gets the 2 - 2*cos term).
    """
    assert inputs.shape == targets.shape, "inputs/targets shape mismatch"
    assert inputs.ndim == 3 and inputs.shape[-1] >= 3
    B, S, F = inputs.shape
    out_dtype = jnp.promote_types(inputs.dtype, targets.dtype)
    n = B * S * F

    lanes, pad_cols, rows, block_rows, pad_rows = _choose_layout(n, lanes, max_block_rows)
    total_pad = pad_cols + pad_rows * lanes
    grid = (rows // block_rows,)

    x = inputs.reshape(-1)
    t = targets.reshape(-1)
    if total_pad:
        # Zero-padding: padded elements produce exactly 0 in either loss branch.
        x = jnp.pad(x, (0, total_pad))
        t = jnp.pad(t, (0, total_pad))
    x2 = x.reshape(rows, lanes)
    t2 = t.reshape(rows, lanes)

    itemsize = max(x2.dtype.itemsize, t2.dtype.itemsize)
    in_tile = block_rows * lanes * itemsize
    out_tile = block_rows * lanes * jnp.dtype(out_dtype).itemsize
    # 2 inputs + 1 output, double-buffered, plus margin; capped for v7x (64 MiB VMEM).
    vmem_limit = int(min(48 << 20, max(32 << 20, 2 * (2 * in_tile + out_tile) + (4 << 20))))

    block_spec = pl.BlockSpec((block_rows, lanes), lambda i: (i, 0))

    if reduction in ("sum", "mean"):
        kern = functools.partial(_reduce_kernel, feat=F, lanes=lanes, block_rows=block_rows)
        total = pl.pallas_call(
            kern,
            out_shape=jax.ShapeDtypeStruct((1, 1), jnp.float32),
            grid_spec=pltpu.PrefetchScalarGridSpec(
                num_scalar_prefetch=0,
                grid=grid,
                in_specs=[block_spec, block_spec],
                out_specs=pl.BlockSpec((1, 1), lambda i: (0, 0)),
            ),
            compiler_params=pltpu.CompilerParams(
                dimension_semantics=("arbitrary",),   # resident scalar accumulator
                vmem_limit_bytes=vmem_limit,
            ),
        )(x2, t2)[0, 0]
        if reduction == "mean":
            total = total / n
        return total.astype(out_dtype)

    # 'none' (and any unrecognized reduction, matching the PyTorch fallthrough)
    kern = functools.partial(_elementwise_kernel, feat=F, lanes=lanes, block_rows=block_rows)
    out2 = pl.pallas_call(
        kern,
        out_shape=jax.ShapeDtypeStruct((rows, lanes), out_dtype),
        grid_spec=pltpu.PrefetchScalarGridSpec(
            num_scalar_prefetch=0,
            grid=grid,
            in_specs=[block_spec, block_spec],
            out_specs=block_spec,
        ),
        compiler_params=pltpu.CompilerParams(
            dimension_semantics=("parallel",),        # embarrassingly parallel; megacore-friendly
            vmem_limit_bytes=vmem_limit,
        ),
    )(x2, t2)
    out = out2.reshape(-1)
    if total_pad:
        out = out[:n]
    return out.reshape(B, S, F)


def _reference(inputs, targets, reduction="none"):
    """Pure-JAX reference mirroring the PyTorch module."""
    da_mask = jnp.ones(targets.shape, dtype=bool).at[:, :, 2].set(False)
    diff = inputs - targets
    ret = jnp.where(da_mask, diff * diff, 2.0 - 2.0 * jnp.cos(diff))
    if reduction == "sum":
        return jnp.sum(ret)
    if reduction == "mean":
        return jnp.mean(ret)
    return ret


if __name__ == "__main__":
    # CombinedLoss has no learnable parameters; only example inputs are needed.
    key = jax.random.PRNGKey(0)
    k1, k2, k3, k4 = jax.random.split(key, 4)

    # Small shape consistent with the module's (N, T, C) layout; C >= 3 so the
    # angular channel (index 2) exists.
    B, S, F = 2, 8, 4
    inputs = jax.random.normal(k1, (B, S, F), dtype=jnp.float32)
    targets = jax.random.normal(k2, (B, S, F), dtype=jnp.float32)

    out = jax.block_until_ready(combined_loss(inputs, targets, reduction="none"))
    ref = _reference(inputs, targets, "none")
    assert out.shape == (B, S, F) and out.dtype == ref.dtype
    assert jnp.allclose(out, ref, atol=1e-5, rtol=1e-5), "elementwise mismatch"

    s = jax.block_until_ready(combined_loss(inputs, targets, reduction="sum"))
    assert jnp.allclose(s, _reference(inputs, targets, "sum"), atol=1e-4, rtol=1e-5), "sum mismatch"

    m = jax.block_until_ready(combined_loss(inputs, targets, reduction="mean"))
    assert jnp.allclose(m, _reference(inputs, targets, "mean"), atol=1e-5, rtol=1e-5), "mean mismatch"

    # Exercise the multi-block grid, row padding, and non-power-of-two F paths
    # with deliberately tiny tiling parameters.
    B2, S2, F2 = 4, 64, 5
    x_big = jax.random.normal(k3, (B2, S2, F2), dtype=jnp.float32)
    t_big = jax.random.normal(k4, (B2, S2, F2), dtype=jnp.float32)
    out2 = jax.block_until_ready(
        combined_loss(x_big, t_big, reduction="none", lanes=128, max_block_rows=8))
    assert jnp.allclose(out2, _reference(x_big, t_big, "none"), atol=1e-5, rtol=1e-5), \
        "multi-block elementwise mismatch"
    s2 = jax.block_until_ready(
        combined_loss(x_big, t_big, reduction="sum", lanes=128, max_block_rows=8))
    assert jnp.allclose(s2, _reference(x_big, t_big, "sum"), atol=1e-3, rtol=1e-5), \
        "multi-block sum mismatch"

    # Exercise the no-padding, exact-divisor path (n = 2*8*8 = 128 divides lanes).
    B3, S3, F3 = 2, 8, 8
    x3 = jax.random.normal(k3, (B3, S3, F3), dtype=jnp.float32)
    t3 = jax.random.normal(k4, (B3, S3, F3), dtype=jnp.float32)
    out3 = jax.block_until_ready(combined_loss(x3, t3, reduction="mean"))
    assert jnp.allclose(out3, _reference(x3, t3, "mean"), atol=1e-5, rtol=1e-5), \
        "no-pad mean mismatch"

    print("KERNEL_OK")
</pallas_src>

<mosaic_0001>
module attributes {stable_mosaic.version = 11 : i64} {
  func.func @_elementwise_kernel(%arg0: i32, %arg1: memref<1x512xf32, #tpu.memory_space<vmem>>, %arg2: memref<1x512xf32, #tpu.memory_space<vmem>>, %arg3: memref<1x512xf32, #tpu.memory_space<vmem>>) attributes {dimension_semantics = [#tpu.dimension_semantics<parallel>], iteration_bounds = array<i64: 1>, scalar_prefetch = 0 : i64, scratch_operands = 0 : i64, tpu.core_type = #tpu.core_type<tc>, window_params = [{transform_indices = @transform_0, window_bounds = array<i64: 1, 512>}, {transform_indices = @transform_1, window_bounds = array<i64: 1, 512>}, {transform_indices = @transform_2, window_bounds = array<i64: 1, 512>}]} {
    %c512_i32 = arith.constant 512 : i32
    %0 = arith.muli %arg0, %c512_i32 : i32
    %1 = tpu.iota {dimensions = array<i32: 0>} : vector<1x512xi32>
    %2 = tpu.iota {dimensions = array<i32: 1>} : vector<1x512xi32>
    %c512_i32_0 = arith.constant 512 : i32
    %3 = vector.broadcast %c512_i32_0 : i32 to vector<1x512xi32>
    %4 = arith.muli %1, %3 : vector<1x512xi32>
    %5 = vector.broadcast %0 : i32 to vector<1x512xi32>
    %6 = arith.addi %5, %4 : vector<1x512xi32>
    %7 = arith.addi %6, %2 : vector<1x512xi32>
    %c4_i32 = arith.constant 4 : i32
    %c0_i32 = arith.constant 0 : i32
    %8 = arith.cmpi eq, %c4_i32, %c0_i32 : i32
    %c1_i32 = arith.constant 1 : i32
    %9 = arith.select %8, %c1_i32, %c4_i32 : i32
    %10 = vector.broadcast %9 : i32 to vector<1x512xi32>
    %11 = arith.remsi %7, %10 : vector<1x512xi32>
    %c0_i32_1 = arith.constant 0 : i32
    %12 = vector.broadcast %c0_i32_1 : i32 to vector<1x512xi32>
    %13 = arith.cmpi ne, %11, %12 : vector<1x512xi32>
    %c0_i32_2 = arith.constant 0 : i32
    %14 = vector.broadcast %c0_i32_2 : i32 to vector<1x512xi32>
    %15 = arith.cmpi slt, %11, %14 : vector<1x512xi32>
    %c0_i32_3 = arith.constant 0 : i32
    %16 = arith.cmpi slt, %9, %c0_i32_3 : i32
    %17 = vector.broadcast %16 : i1 to vector<1x512xi1>
    %18 = vector.broadcast %17 : vector<1x512xi1> to vector<1x512xi1>
    %19 = arith.xori %15, %18 : vector<1x512xi1>
    %20 = arith.andi %19, %13 : vector<1x512xi1>
    %21 = vector.broadcast %9 : i32 to vector<1x512xi32>
    %22 = arith.addi %11, %21 : vector<1x512xi32>
    %23 = arith.select %20, %22, %11 : vector<1x512xi1>, vector<1x512xi32>
    %c2_i32 = arith.constant 2 : i32
    %24 = vector.broadcast %c2_i32 : i32 to vector<1x512xi32>
    %25 = arith.cmpi ne, %23, %24 : vector<1x512xi32>
    %c0 = arith.constant 0 : index
    %c0_4 = arith.constant 0 : index
    %26 = vector.load %arg1[%c0, %c0_4] : memref<1x512xf32, #tpu.memory_space<vmem>>, vector<1x512xf32>
    %c0_5 = arith.constant 0 : index
    %c0_6 = arith.constant 0 : index
    %27 = vector.load %arg2[%c0_5, %c0_6] : memref<1x512xf32, #tpu.memory_space<vmem>>, vector<1x512xf32>
    %28 = arith.subf %26, %27 : vector<1x512xf32>
    %29 = arith.mulf %28, %28 : vector<1x512xf32>
    %30 = math.cos %28 : vector<1x512xf32>
    %cst = arith.constant 2.000000e+00 : f32
    %31 = vector.broadcast %cst : f32 to vector<1x512xf32>
    %32 = arith.mulf %31, %30 : vector<1x512xf32>
    %cst_7 = arith.constant 2.000000e+00 : f32
    %33 = vector.broadcast %cst_7 : f32 to vector<1x512xf32>
    %34 = arith.subf %33, %32 : vector<1x512xf32>
    %35 = arith.select %25, %29, %34 : vector<1x512xi1>, vector<1x512xf32>
    %c0_8 = arith.constant 0 : index
    %c0_9 = arith.constant 0 : index
    %36 = vector.load %arg3[%c0_8, %c0_9] : memref<1x512xf32, #tpu.memory_space<vmem>>, vector<1x512xf32>
    tpu.vector_store %arg3[%c0_8, %c0_9], %35 {strides = array<i32>} : memref<1x512xf32, #tpu.memory_space<vmem>>, vector<1x512xf32>,
    return
  }
  func.func @transform_0(%arg0: i32) -> (i32, i32) {
    %c0_i32 = arith.constant 0 : i32
    %c0_i32_0 = arith.constant 0 : i32
    return %arg0, %c0_i32 : i32, i32
  }
  func.func @transform_1(%arg0: i32) -> (i32, i32) {
    %c0_i32 = arith.constant 0 : i32
    %c0_i32_0 = arith.constant 0 : i32
    return %arg0, %c0_i32 : i32, i32
  }
  func.func @transform_2(%arg0: i32) -> (i32, i32) {
    %c0_i32 = arith.constant 0 : i32
    %c0_i32_0 = arith.constant 0 : i32
    return %arg0, %c0_i32 : i32, i32
  }
}

</mosaic_0001>

<llo_original>
// kernel: tpu_custom_call.1
$region0: #{tpu_custom_call.1}
  #allocation0 [shape = 'u32[]', space=smem, size = 0x4, offset = 0x4, fixed_abs, tag = 'smem constant byte address 0x4 - core index']
  #allocation1 [shape = 'u32[144,128]{1,0:T(1,128)}', space=vmem, size = 0x12000, scoped, tag = 'internal scratch']
  %s0 = inlined_call_operand.hbm [shape: f32[1,512], index: 0, kind: input, shape index: {}]
  %s1 = inlined_call_operand.hbm [shape: f32[1,512], index: 1, kind: input, shape index: {}]
  %s2 = inlined_call_operand.hbm [shape: f32[1,512], index: 2, kind: output, shape index: {}]
  %s3 = sld [smem:[#allocation0]]
  $region26: #{tpu_custom_call.1} parent=0
    _
  %s5 = ssub.s32 1, %s3
  %s6 = scalar_select 0, %s5, %s3
  $region1: #{tpu_custom_call.1} parent=0
    #allocation2 [shape = 'u8[2048]{0}', space=vmem, size = 0x800, scoped, tag = 'input window, operand 0, single buffered']
    #allocation3 [shape = 's32[1]{0}', space=sflag, size = 0x4, scoped, tag = 'scoped memory for tpu_custom_call.1']
    #allocation4 [shape = 's32[1]{0}', space=sflag, size = 0x4, scoped, tag = 'scoped memory for tpu_custom_call.1']
    #allocation5 [shape = 'u8[2048]{0}', space=vmem, size = 0x800, scoped, tag = 'input window, operand 1, single buffered']
    #allocation6 [shape = 's32[1]{0}', space=sflag, size = 0x4, scoped, tag = 'scoped memory for tpu_custom_call.1']
    #allocation7 [shape = 'u8[2048]{0}', space=vmem, size = 0x800, scoped, tag = 'output window, operand 0, single buffered']
    %7 = vsyncpa [#allocation3], 0
    %8 = vsyncpa [#allocation6], 0
    %9 = vsyncpa [#allocation4], 0
    // Predicated region
    $region2: #{tpu_custom_call.1} parent=1 // pred_check
      _
    $region3: #{tpu_custom_call.1} parent=1 // pred_check_branch
      %11 = sbr.rel (0) target = $region5
    $region4: #{tpu_custom_call.1} parent=1 // pred_region
      %s13 = ssub.s32 64, 64
      %14 = vsyncadd [#allocation3], %s13
      %s16 = sshll.u32 [#allocation2], 4
      %s17 = int_to_ptr.vmem [resolvable:$true] %s16
      %19 = dma.hbm_to_vmem [thread:$0]  %s0, 64, %s17, [#allocation3]
    $region5: #{tpu_custom_call.1} parent=1 // pred_fallthru
      _
    // Predicated region
    $region6: #{tpu_custom_call.1} parent=1 // pred_check
      _
    $region7: #{tpu_custom_call.1} parent=1 // pred_check_branch
      %21 = sbr.rel (0) target = $region9
    $region8: #{tpu_custom_call.1} parent=1 // pred_region
      %s23 = ssub.s32 64, 64
      %24 = vsyncadd [#allocation6], %s23
      %s26 = sshll.u32 [#allocation5], 4
      %s27 = int_to_ptr.vmem [resolvable:$true] %s26
      %29 = dma.hbm_to_vmem [thread:$0]  %s1, 64, %s27, [#allocation6]
    $region9: #{tpu_custom_call.1} parent=1 // pred_fallthru
      _
    // Predicated region
    $region10: #{tpu_custom_call.1} parent=1 // pred_check
      _
    $region11: #{tpu_custom_call.1} parent=1 // pred_check_branch
      %31 = sbr.rel (0) target = $region13
    $region12: #{tpu_custom_call.1} parent=1 // pred_region
      %32 = dma.done [#allocation3], 64
    $region13: #{tpu_custom_call.1} parent=1 // pred_fallthru
      _
    // Predicated region
    $region14: #{tpu_custom_call.1} parent=1 // pred_check
      _
    $region15: #{tpu_custom_call.1} parent=1 // pred_check_branch
      %34 = sbr.rel (0) target = $region17
    $region16: #{tpu_custom_call.1} parent=1 // pred_region
      %35 = dma.done [#allocation6], 64
    $region17: #{tpu_custom_call.1} parent=1 // pred_fallthru
      _
    %s36 = smul.u32 0, 512
    %v37 = vlaneseq
    %v38 = vshrl.u32 %v37, 7
    %v39 = vlaneseq
    %v40 = vand.u32 %v39, 127
    %v41 = vadd.s32 %v40, 128
    %v42 = vadd.s32 %v40, 256
    %v43 = vadd.s32 %v40, 384
    %v44 = vmul.u32 %v38, 512
    %v45 = vstv %s36
    %v46 = vadd.s32 %v45, %v44
    %v47 = vadd.s32 %v46, %v40
    %v48 = vadd.s32 %v46, %v41
    %v49 = vadd.s32 %v46, %v42
    %v50 = vadd.s32 %v46, %v43
    %vm51 = vcmp.lt.s32.totalorder %v47, 0
    %v52 = vsub.s32 0, %v47
    %v53 = vsel %vm51, %v52, %v47
    %v54 = vshrl.u32 %v53, 2
    %v55 = vand.u32 %v53, 3
    %v56 = vsub.s32 0, %v55
    %v57 = vsel %vm51, %v56, %v55
    %vm58 = vcmp.lt.s32.totalorder %v48, 0
    %v59 = vsub.s32 0, %v48
    %v60 = vsel %vm58, %v59, %v48
    %v61 = vshrl.u32 %v60, 2
    %v62 = vand.u32 %v60, 3
    %v63 = vsub.s32 0, %v62
    %v64 = vsel %vm58, %v63, %v62
    %vm65 = vcmp.lt.s32.totalorder %v49, 0
    %v66 = vsub.s32 0, %v49
    %v67 = vsel %vm65, %v66, %v49
    %v68 = vshrl.u32 %v67, 2
    %v69 = vand.u32 %v67, 3
    %v70 = vsub.s32 0, %v69
    %v71 = vsel %vm65, %v70, %v69
    %vm72 = vcmp.lt.s32.totalorder %v50, 0
    %v73 = vsub.s32 0, %v50
    %v74 = vsel %vm72, %v73, %v50
    %v75 = vshrl.u32 %v74, 2
    %v76 = vand.u32 %v74, 3
    %v77 = vsub.s32 0, %v76
    %v78 = vsel %vm72, %v77, %v76
    %vm79 = vcmp.ne.s32.totalorder %v57, 0
    %vm80 = vcmp.ne.s32.totalorder %v64, 0
    %vm81 = vcmp.ne.s32.totalorder %v71, 0
    %vm82 = vcmp.ne.s32.totalorder %v78, 0
    %vm83 = vcmp.lt.s32.totalorder %v57, 0
    %vm84 = vcmp.lt.s32.totalorder %v64, 0
    %vm85 = vcmp.lt.s32.totalorder %v71, 0
    %vm86 = vcmp.lt.s32.totalorder %v78, 0
    %vm87 = vmand %vm83, %vm79
    %vm88 = vmand %vm84, %vm80
    %vm89 = vmand %vm85, %vm81
    %vm90 = vmand %vm86, %vm82
    %v91 = vadd.s32 %v57, 4
    %v92 = vadd.s32 %v64, 4
    %v93 = vadd.s32 %v71, 4
    %v94 = vadd.s32 %v78, 4
    %v95 = vsel %vm87, %v91, %v57
    %v96 = vsel %vm88, %v92, %v64
    %v97 = vsel %vm89, %v93, %v71
    %v98 = vsel %vm90, %v94, %v78
    %vm99 = vcmp.ne.s32.totalorder %v95, 2
    %vm100 = vcmp.ne.s32.totalorder %v96, 2
    %vm101 = vcmp.ne.s32.totalorder %v97, 2
    %vm102 = vcmp.ne.s32.totalorder %v98, 2
    %v103 = vld [vmem:[#allocation2] sm:$0xf]
    %v104 = vld [vmem:[#allocation5] sm:$0xf]
    %v105 = vsub.f32 %v103, %v104
    %v106 = vmul.f32 %v105, %v105
    %v107 = vand.u32 2147483647, %v105
    %vm108 = vcmp.le.f32.partialorder %v107, 0.7853982
    %vm109 = vcmp.lt.s32.totalorder %v105, 0
    %v110 = vand.u32 %v105, 2139095040
    %v111 = vshrl.u32 %v110, 23
    %v112 = vsub.s32 %v111, 127
    %v113 = vand.u32 2147483647, %v105
    %v114 = vand.u32 %v113, 8388607
    %v115 = vor.u32 %v114, 8388608
    %v116 = vsub.s32 0, %v115
    %v117 = vadd.s32 %v112, 1
    %vm118 = vcmp.gt.s32.totalorder %v117, 0
    %v119 = vsel %vm118, %v117, 0
    %v120 = vshrl.u32 %v119, 5
    %v121 = vand.u32 %v119, 31
    %v122 = vsub.s32 32, %v121
    %v123 = vshrl.u32 683565275, %v122
    %v124 = vshll.u32 683565275, %v121
    %v125 = vshrl.u32 2475754826, %v122
    %v126 = vor.u32 %v124, %v125
    %v127 = vshll.u32 2475754826, %v121
    %v128 = vshrl.u32 2131351028, %v122
    %v129 = vor.u32 %v127, %v128
    %v130 = vshll.u32 2131351028, %v121
    %v131 = vshrl.u32 2102212464, %v122
    %v132 = vor.u32 %v130, %v131
    %v133 = vshll.u32 2102212464, %v121
    %v134 = vshrl.u32 920167782, %v122
    %v135 = vor.u32 %v133, %v134
    %v136 = vshll.u32 920167782, %v121
    %v137 = vshrl.u32 1326507024, %v122
    %v138 = vor.u32 %v136, %v137
    %vm139 = vcmp.lt.s32.totalorder %v120, 1
    %vm140 = vcmp.lt.s32.totalorder %v120, 2
    %vm141 = vcmp.lt.s32.totalorder %v120, 3
    %vm142 = vcmp.lt.s32.totalorder %v120, 4
    %v143 = vsel %vm139, %v123, %v126
    %v144 = vsel %vm142, %v132, 2102212464
    %v145 = vsel %vm141, %v129, %v144
    %v146 = vsel %vm140, %v143, %v145
    %v147 = vsel %vm139, %v126, %v129
    %v148 = vsel %vm142, %v135, 920167782
    %v149 = vsel %vm141, %v132, %v148
    %v150 = vsel %vm140, %v147, %v149
    %v151 = vsel %vm139, %v129, %v132
    %v152 = vsel %vm142, %v138, 1326507024
    %v153 = vsel %vm141, %v135, %v152
    %v154 = vsel %vm140, %v151, %v153
    %v155 = vshll.u32 %v115, 8
    %v156 = vmul.u32.u64.compose %v155, %v154
    %v157 = vextract.low.u32 %v156
    %v158 = vextract.high.u32 %v156
    %v159 = vmul.u32.u64.compose %v155, %v150
    %v160 = vextract.low.u32 %v159
    %v161 = vextract.high.u32 %v159
    %v162 = vmul.u32 %v155, %v146
    %v163 = vadd.s32 %v158, %v160
    %vm164 = vc.u32 %v158, %v160
    %v165 = vadd.s32 %v161, 1
    %v166 = vsel %vm164, %v165, %v161
    %v167 = vadd.s32 %v162, %v166
    %v168 = vadd.s32 %v167, 536870912
    %v169 = vshrl.u32 %v168, 30
    %v170 = vshll.u32 %v169, 30
    %v171 = vsub.s32 %v167, %v170
    %vm172 = vcmp.lt.s32.totalorder %v171, 0
    %v173 = vsub.s32 0, %v171
    %v174 = vsel %vm172, %v173, %v171
    %v175 = vclz %v174
    %v176 = vsub.s32 %v175, 2
    %vm177 = vcmp.gt.s32.totalorder 0, %v176
    %v178 = vsel %vm177, 0, %v176
    %v179 = vsub.s32 32, %v178
    %v180 = vshll.u32 %v171, %v178
    %v181 = vshrl.u32 %v163, %v179
    %v182 = vor.u32 %v180, %v181
    %v183 = vsub.s32 4294967266, %v178
    %v184 = vadd.s32 %v183, 127
    %v185 = vshll.u32 %v184, 23
    %v186 = vor.u32 4788187, %v185
    %v187 = vand.u32 2147483647, %v186
    %v189 = vcvt.s32.f32 %v182
    %v190 = vmul.f32 %v189, %v187
    %v191 = vxor.u32 %v190, 2147483648
    %v192 = vsel %vm109, %v191, %v190
    %v193 = vsub.s32 4, %v169
    %v194 = vsel %vm109, %v193, %v169
    %v195 = vsel %vm108, %v105, %v192
    %v196 = vsel %vm108, 0, %v194
    %v197 = vcosq.f32.pop %v195
    %v198 = vsinq.f32.pop %v195
    %vm199 = vweird.f32 %v105
    %v200 = vand.u32 %v196, 3
    %vm201 = vcmp.lt.s32.totalorder %v200, 2
    %vm202 = vcmp.eq.s32.totalorder %v200, 0
    %v203 = vxor.u32 %v198, 2147483648
    %v204 = vsel %vm202, %v197, %v203
    %vm205 = vcmp.eq.s32.totalorder %v200, 2
    %v206 = vxor.u32 %v197, 2147483648
    %v207 = vsel %vm205, %v206, %v198
    %v208 = vsel %vm201, %v204, %v207
    %v209 = vsel %vm199, nan, %v208
    %v210 = vmul.f32 %v209, 2.0
    %v211 = vsub.f32 2.0, %v210
    %v213 = vlaneseq
    %v214 = vshrl.u32 %v213, 7
    %v215 = vsub.s32 0, %v214
    %v216 = vrot.slane %v106, %v215
    %v217 = vlaneseq
    %v218 = vshrl.u32 %v217, 7
    %v219 = vsub.s32 1, %v218
    %v220 = vrot.slane %v106, %v219
    %v221 = vlaneseq
    %v222 = vshrl.u32 %v221, 7
    %v223 = vsub.s32 2, %v222
    %v224 = vrot.slane %v106, %v223
    %v225 = vlaneseq
    %v226 = vshrl.u32 %v225, 7
    %v227 = vsub.s32 3, %v226
    %v228 = vrot.slane %v106, %v227
    %v234 = vlaneseq
    %v235 = vshrl.u32 %v234, 7
    %v236 = vsub.s32 0, %v235
    %v237 = vrot.slane %v211, %v236
    %v238 = vlaneseq
    %v239 = vshrl.u32 %v238, 7
    %v240 = vsub.s32 1, %v239
    %v241 = vrot.slane %v211, %v240
    %v242 = vlaneseq
    %v243 = vshrl.u32 %v242, 7
    %v244 = vsub.s32 2, %v243
    %v245 = vrot.slane %v211, %v244
    %v246 = vlaneseq
    %v247 = vshrl.u32 %v246, 7
    %v248 = vsub.s32 3, %v247
    %v249 = vrot.slane %v211, %v248
    %v254 = vsel %vm99, %v216, %v237
    %v255 = vsel %vm100, %v220, %v241
    %v256 = vsel %vm101, %v224, %v245
    %v257 = vsel %vm102, %v228, %v249
    %v262 = vcombine.low %v254, %v255
    %v263 = vcombine.low %v256, %v257
    %v265 = vunpack.c.l.s4 1966171168
    %v266 = vunpack.c.0.s8 %v265
    %v267 = vlaneseq
    %v268 = vshrl.u32 %v267, 7
    %v269 = vsub.s32 %v266, %v268
    %v270 = vrot.slane %v262, %v269
    %v272 = vunpack.c.l.s4 1966171168
    %v273 = vunpack.c.0.s8 %v272
    %v274 = vlaneseq
    %v275 = vshrl.u32 %v274, 7
    %v276 = vsub.s32 %v273, %v275
    %v277 = vrot.slane %v263, %v276
    %v278 = vcombine.low %v270, %v277
    %v280 = vunpack.c.l.s4 1966171168
    %v281 = vunpack.c.0.s8 %v280
    %v282 = vlaneseq
    %v283 = vshrl.u32 %v282, 7
    %v284 = vsub.s32 %v281, %v283
    %v285 = vrot.slane %v278, %v284
    %v287 = vlaneseq
    %vm288 = vcmp.ge.s32.totalorder %v287, 0
    %vm289 = vcmp.lt.s32.totalorder %v287, 512
    %vm290 = vmand %vm288, %vm289
    %291 = vst.msk [vmem:[#allocation7] sm:$0xf] %vm290, %v285
    // Predicated region
    $region18: #{tpu_custom_call.1} parent=1 // pred_check
      _
    $region19: #{tpu_custom_call.1} parent=1 // pred_check_branch
      %293 = sbr.rel (0) target = $region21
    $region20: #{tpu_custom_call.1} parent=1 // pred_region
      %s295 = ssub.s32 64, 64
      %296 = vsyncadd [#allocation4], %s295
      %s298 = sshll.u32 [#allocation7], 4
      %s299 = int_to_ptr.vmem [resolvable:$true] %s298
      %301 = dma.vmem_to_hbm [thread:$0]  %s299, 64, %s2, [#allocation4]
    $region21: #{tpu_custom_call.1} parent=1 // pred_fallthru
      _
    // Predicated region
    $region22: #{tpu_custom_call.1} parent=1 // pred_check
      _
    $region23: #{tpu_custom_call.1} parent=1 // pred_check_branch
      %303 = sbr.rel (0) target = $region25
    $region24: #{tpu_custom_call.1} parent=1 // pred_region
      %304 = dma.done [#allocation4], 64
    $region25: #{tpu_custom_call.1} parent=1 // pred_fallthru
      _
    %305 = vsyncpa [#allocation3], 1
    %306 = vsyncpa [#allocation6], 1
    %307 = vsyncpa [#allocation4], 1

</llo_original>
